<compile_context>
chip_gen: v6e
topology: v6e:2x2x1
jax: 0.10.0
libtpu: 0.0.40
codegen_flags: <defaults>
</compile_context>

<pallas_src>
import jax
import jax.numpy as jnp
from jax.experimental import pallas as pl
from jax.experimental.pallas import tpu as pltpu


def ese_kernel(x_ref, w_ref, b_ref, o_ref):
    """Fused EffectiveSE: spatial mean -> 1x1 conv (matmul) -> hardsigmoid -> scale.

    x_ref: (1, HW, C)  one image, channels-last
    w_ref: (C, C)      fc weight laid out (Cin, Cout)
    b_ref: (1, C)      fc bias
    o_ref: (1, HW, C)
    """
    x = x_ref[0]                                                  # (HW, C) f32
    hw = x.shape[0]
    mean = jnp.sum(x, axis=0, keepdims=True) * (1.0 / hw)         # (1, C)
    se = jnp.dot(mean, w_ref[...],
                 preferred_element_type=jnp.float32) + b_ref[...]  # (1, C)
    # PyTorch Hardsigmoid: clamp(x/6 + 1/2, 0, 1)
    gate = jnp.clip(se * (1.0 / 6.0) + 0.5, 0.0, 1.0)             # (1, C)
    o_ref[0] = (x * gate).astype(o_ref.dtype)


def effective_se_forward(x_nchw, fc_w, fc_b):
    """x_nchw: (N, C, H, W); fc_w: (C, C, 1, 1) Conv2d weight; fc_b: (C,)."""
    N, C, H, W = x_nchw.shape
    HW = H * W

    # NCHW -> (N, H*W, C): channels on the lane axis, spatial rows on sublanes.
    x = jnp.transpose(x_nchw, (0, 2, 3, 1)).reshape(N, HW, C).astype(jnp.float32)
    # Conv2d 1x1 weight (Cout, Cin, 1, 1) -> (Cin, Cout) so that se = mean @ w + b.
    w = jnp.transpose(fc_w[:, :, 0, 0], (1, 0)).astype(jnp.float32)
    b = fc_b.reshape(1, C).astype(jnp.float32)

    # TODO(synk): for very large H*W (plane exceeding VMEM) a two-pass tiled variant
    # (reduce pass + scale pass) would be needed; typical ppyolo planes fit easily.
    out = pl.pallas_call(
        ese_kernel,
        out_shape=jax.ShapeDtypeStruct((N, HW, C), jnp.float32),
        grid_spec=pltpu.PrefetchScalarGridSpec(
            num_scalar_prefetch=0,
            grid=(N,),
            in_specs=[
                pl.BlockSpec((1, HW, C), lambda n: (n, 0, 0)),
                pl.BlockSpec((C, C), lambda n: (0, 0)),
                pl.BlockSpec((1, C), lambda n: (0, 0)),
            ],
            out_specs=pl.BlockSpec((1, HW, C), lambda n: (n, 0, 0)),
        ),
        compiler_params=pltpu.CompilerParams(
            dimension_semantics=("parallel",),   # batch axis -> both TCs on v7x
        ),
    )(x, w, b)

    return jnp.transpose(out.reshape(N, H, W, C), (0, 3, 1, 2))   # back to NCHW


# ---------------------------------------------------------------------------
# Pure-JAX reference (for correctness check)
# ---------------------------------------------------------------------------
def effective_se_reference(x_nchw, fc_w, fc_b):
    x_se = jnp.mean(x_nchw, axis=(2, 3), keepdims=True)            # (N, C, 1, 1)
    se = jnp.einsum('nc,oc->no', x_se[:, :, 0, 0], fc_w[:, :, 0, 0]) + fc_b
    gate = jnp.clip(se / 6.0 + 0.5, 0.0, 1.0)                      # hardsigmoid
    return x_nchw * gate[:, :, None, None]


# ---------------------------------------------------------------------------
if __name__ == "__main__":
    key = jax.random.PRNGKey(0)
    kx, kw, kb = jax.random.split(key, 3)

    N, C, H, W = 2, 128, 16, 16
    x = jax.random.normal(kx, (N, C, H, W), dtype=jnp.float32)

    # nn.Conv2d default init scale ~ 1/sqrt(fan_in); exact init irrelevant for the check.
    fc_w = jax.random.normal(kw, (C, C, 1, 1), dtype=jnp.float32) / jnp.sqrt(C)
    fc_b = jax.random.normal(kb, (C,), dtype=jnp.float32) * 0.1

    out = effective_se_forward(x, fc_w, fc_b)
    out = jax.block_until_ready(out)

    ref = effective_se_reference(x, fc_w, fc_b)
    assert out.shape == (N, C, H, W), out.shape
    err = float(jnp.max(jnp.abs(out - ref)))
    assert jnp.allclose(out, ref, atol=1e-5, rtol=1e-5), err

    print("KERNEL_OK")
</pallas_src>

<mosaic_0001>
module attributes {stable_mosaic.version = 11 : i64} {
  func.func @ese_kernel(%arg0: i32, %arg1: memref<1x256x128xf32, #tpu.memory_space<vmem>>, %arg2: memref<128x128xf32, #tpu.memory_space<vmem>>, %arg3: memref<1x128xf32, #tpu.memory_space<vmem>>, %arg4: memref<1x256x128xf32, #tpu.memory_space<vmem>>) attributes {dimension_semantics = [#tpu.dimension_semantics<parallel>], iteration_bounds = array<i64: 2>, scalar_prefetch = 0 : i64, scratch_operands = 0 : i64, tpu.core_type = #tpu.core_type<tc>, window_params = [{transform_indices = @transform_0, window_bounds = array<i64: 1, 256, 128>}, {pipeline_mode = #tpu.pipeline_mode<synchronous>, transform_indices = @transform_1, window_bounds = array<i64: 128, 128>}, {pipeline_mode = #tpu.pipeline_mode<synchronous>, transform_indices = @transform_2, window_bounds = array<i64: 1, 128>}, {transform_indices = @transform_3, window_bounds = array<i64: 1, 256, 128>}]} {
    %c0 = arith.constant 0 : index
    %c0_0 = arith.constant 0 : index
    %c0_1 = arith.constant 0 : index
    %0 = vector.load %arg1[%c0, %c0_0, %c0_1] : memref<1x256x128xf32, #tpu.memory_space<vmem>>, vector<1x256x128xf32>
    %1 = vector.shape_cast %0 : vector<1x256x128xf32> to vector<256x128xf32>
    %cst = arith.constant dense<0.000000e+00> : vector<128xf32>
    %2 = vector.multi_reduction <add>, %1, %cst [0] : vector<256x128xf32> to vector<128xf32>
    %3 = vector.shape_cast %2 : vector<128xf32> to vector<1x128xf32>
    %cst_2 = arith.constant 3.906250e-03 : f32
    %4 = vector.broadcast %cst_2 : f32 to vector<1x128xf32>
    %5 = arith.mulf %3, %4 : vector<1x128xf32>
    %c0_3 = arith.constant 0 : index
    %c0_4 = arith.constant 0 : index
    %6 = vector.load %arg2[%c0_3, %c0_4] : memref<128x128xf32, #tpu.memory_space<vmem>>, vector<128x128xf32>
    %cst_5 = arith.constant dense<0.000000e+00> : vector<1x128xf32>
    %7 = tpu.matmul %5, %6, %cst_5 {dimension_numbers = #tpu.dot_dimension_numbers<[1], [0], [0], [1], [0, 0, 1, 1], [], []>} : vector<1x128xf32>, vector<128x128xf32>, vector<1x128xf32> -> vector<1x128xf32>
    %c0_6 = arith.constant 0 : index
    %c0_7 = arith.constant 0 : index
    %8 = vector.load %arg3[%c0_6, %c0_7] : memref<1x128xf32, #tpu.memory_space<vmem>>, vector<1x128xf32>
    %9 = arith.addf %7, %8 : vector<1x128xf32>
    %cst_8 = arith.constant 0.166666672 : f32
    %10 = vector.broadcast %cst_8 : f32 to vector<1x128xf32>
    %11 = arith.mulf %9, %10 : vector<1x128xf32>
    %cst_9 = arith.constant 5.000000e-01 : f32
    %12 = vector.broadcast %cst_9 : f32 to vector<1x128xf32>
    %13 = arith.addf %11, %12 : vector<1x128xf32>
    %cst_10 = arith.constant 0.000000e+00 : f32
    %cst_11 = arith.constant 1.000000e+00 : f32
    %14 = vector.broadcast %cst_10 : f32 to vector<1x128xf32>
    %15 = arith.maximumf %14, %13 : vector<1x128xf32>
    %16 = vector.broadcast %cst_11 : f32 to vector<1x128xf32>
    %17 = arith.minimumf %16, %15 : vector<1x128xf32>
    %18 = vector.broadcast %17 : vector<1x128xf32> to vector<256x128xf32>
    %19 = arith.mulf %1, %18 : vector<256x128xf32>
    %c0_12 = arith.constant 0 : index
    %c0_13 = arith.constant 0 : index
    %c0_14 = arith.constant 0 : index
    %20 = vector.load %arg4[%c0_12, %c0_13, %c0_14] : memref<1x256x128xf32, #tpu.memory_space<vmem>>, vector<1x256x128xf32>
    %21 = vector.shape_cast %20 : vector<1x256x128xf32> to vector<256x128xf32>
    %22 = vector.shape_cast %19 : vector<256x128xf32> to vector<1x256x128xf32>
    tpu.vector_store %arg4[%c0_12, %c0_13, %c0_14], %22 {strides = array<i32>} : memref<1x256x128xf32, #tpu.memory_space<vmem>>, vector<1x256x128xf32>,
    return
  }
  func.func @transform_0(%arg0: i32) -> (i32, i32, i32) {
    %c0_i32 = arith.constant 0 : i32
    %c0_i32_0 = arith.constant 0 : i32
    %c0_i32_1 = arith.constant 0 : i32
    return %arg0, %c0_i32, %c0_i32_0 : i32, i32, i32
  }
  func.func @transform_1(%arg0: i32) -> (i32, i32) {
    %c0_i32 = arith.constant 0 : i32
    %c0_i32_0 = arith.constant 0 : i32
    %c0_i32_1 = arith.constant 0 : i32
    return %c0_i32, %c0_i32_0 : i32, i32
  }
  func.func @transform_2(%arg0: i32) -> (i32, i32) {
    %c0_i32 = arith.constant 0 : i32
    %c0_i32_0 = arith.constant 0 : i32
    %c0_i32_1 = arith.constant 0 : i32
    return %c0_i32, %c0_i32_0 : i32, i32
  }
  func.func @transform_3(%arg0: i32) -> (i32, i32, i32) {
    %c0_i32 = arith.constant 0 : i32
    %c0_i32_0 = arith.constant 0 : i32
    %c0_i32_1 = arith.constant 0 : i32
    return %arg0, %c0_i32, %c0_i32_0 : i32, i32, i32
  }
}

</mosaic_0001>

<llo_original>
// kernel: tpu_custom_call.1
$region0: #{tpu_custom_call.1}
  #allocation0 [shape = 'u32[]', space=smem, size = 0x4, offset = 0x4, fixed_abs, tag = 'smem constant byte address 0x4 - core index']
  #allocation1 [shape = 'u32[144,128]{1,0:T(1,128)}', space=vmem, size = 0x12000, scoped, tag = 'internal scratch']
  %s0 = inlined_call_operand.hbm [shape: f32[2,256,128], index: 0, kind: input, shape index: {}]
  %s1 = inlined_call_operand.hbm [shape: f32[128,128], index: 1, kind: input, shape index: {}]
  %s2 = inlined_call_operand.vmem [shape: f32[1,128], index: 2, kind: input, shape index: {}]
  %s3 = inlined_call_operand.hbm [shape: f32[2,256,128], index: 3, kind: output, shape index: {}]
  %s4 = sld [smem:[#allocation0]]
  $region53: #{tpu_custom_call.1} parent=0
    _
  %s6 = ssub.s32 1, %s4
  %s7 = scalar_select 0, %s6, %s4
  $region1: #{tpu_custom_call.1} parent=0
    #allocation2 [shape = 'u8[262144]{0}', space=vmem, size = 0x40000, scoped, tag = 'input window, operand 0']
    #allocation3 [shape = 's32[2]{0}', space=sflag, size = 0x8, scoped, tag = 'scoped memory for tpu_custom_call.1']
    #allocation4 [shape = 's32[2]{0}', space=sflag, size = 0x8, scoped, tag = 'scoped memory for tpu_custom_call.1']
    #allocation5 [shape = 'u8[65536]{0}', space=vmem, size = 0x10000, scoped, tag = 'input window, operand 1, single buffered']
    #allocation6 [shape = 's32[1]{0}', space=sflag, size = 0x4, scoped, tag = 'scoped memory for tpu_custom_call.1']
    #allocation7 [shape = 'u8[262144]{0}', space=vmem, size = 0x40000, scoped, tag = 'output window, operand 0']
    %8 = vsyncpa [#allocation3], 0
    %s9 = scalar_lea.sflag [#allocation3], 1
    %10 = vsyncpa %s9, 0
    %11 = vsyncpa [#allocation6], 0
    %12 = vsyncpa [#allocation4], 0
    %s13 = scalar_lea.sflag [#allocation4], 1
    %14 = vsyncpa %s13, 0
    loop: start=0, step=1, limit=4
    $region2: #{tpu_custom_call.1} parent=1 // loop_pre_header
      _
    $region3: #{tpu_custom_call.1} parent=1 // loop_header
      %s16 = sphi 0, %s20
      %p17 = scmp.ge.s32.totalorder %s16, 4
      %s26 = sphi 0, %s28
      %s29 = sphi 0, %s26
      %s30 = sphi 0, %s29
      %s46 = sphi 0, %s30
      %s50 = sphi 0, %s50
      %s52 = sphi 0, %s50
      %s53 = sphi 0, %s52
      %s67 = sphi 0, %s53
      %s71 = sphi 0, %s71
      %s73 = sphi 0, %s71
      %s74 = sphi 0, %s73
      %s88 = sphi 0, %s74
      %s94 = sphi 0, %s96
      %s97 = sphi 0, %s94
      %s98 = sphi 0, %s97
      %s114 = sphi 0, %s98
    $region4: #{tpu_custom_call.1} parent=1 // loop_header_branch
      %19 = sbr.rel (%p17) target = $region8
    $region5: #{tpu_custom_call.1} parent=1 // loop_body
      %s21 = ssub.s32 %s16, 1
      %s22 = ssub.s32 %s16, 2
      %s23 = sadd.s32 %s16, 1
      %s24 = ssub.s32 %s16, %s23
      %p25 = scmp.eq.s32.totalorder %s24, 0
      %s27 = sadd.s32 %s26, 1
      %s28 = scalar_select %p25, %s26, %s27
      %p31 = pneg %p25
      %p32 = scmp.eq.s32.totalorder %s16, 1
      %p33 = por %p31, %p32
      %p34 = scmp.ne.s32.totalorder %s26, %s29
      %p35 = scmp.eq.s32.totalorder %s16, 0
      %p36 = por %p34, %p35
      %p37 = scmp.ne.s32.totalorder %s26, %s29
      %p38 = scmp.eq.s32.totalorder %s21, 1
      %p39 = por %p37, %p38
      %p40 = scmp.ne.s32.totalorder %s29, %s30
      %p41 = scmp.eq.s32.totalorder %s21, 0
      %p42 = por %p40, %p41
      %p43 = scmp.ne.s32.totalorder %s29, %s30
      %p44 = scmp.eq.s32.totalorder %s22, 1
      %p45 = por %p43, %p44
      %p47 = scmp.ne.s32.totalorder %s30, %s46
      %p48 = scmp.eq.s32.totalorder %s22, 0
      %p49 = por %p47, %p48
      %s51 = sadd.s32 %s50, 1
      %p54 = scmp.eq.s32.totalorder %s16, 1
      %p55 = scmp.ne.s32.totalorder %s50, %s52
      %p56 = scmp.eq.s32.totalorder %s16, 0
      %p57 = por %p55, %p56
      %p58 = scmp.ne.s32.totalorder %s50, %s52
      %p59 = scmp.eq.s32.totalorder %s21, 1
      %p60 = por %p58, %p59
      %p61 = scmp.ne.s32.totalorder %s52, %s53
      %p62 = scmp.eq.s32.totalorder %s21, 0
      %p63 = por %p61, %p62
      %p64 = scmp.ne.s32.totalorder %s52, %s53
      %p65 = scmp.eq.s32.totalorder %s22, 1
      %p66 = por %p64, %p65
      %p68 = scmp.ne.s32.totalorder %s53, %s67
      %p69 = scmp.eq.s32.totalorder %s22, 0
      %p70 = por %p68, %p69
      %s72 = sadd.s32 %s71, 1
      %p75 = scmp.eq.s32.totalorder %s16, 1
      %p76 = scmp.ne.s32.totalorder %s71, %s73
      %p77 = scmp.eq.s32.totalorder %s16, 0
      %p78 = por %p76, %p77
      %p79 = scmp.ne.s32.totalorder %s71, %s73
      %p80 = scmp.eq.s32.totalorder %s21, 1
      %p81 = por %p79, %p80
      %p82 = scmp.ne.s32.totalorder %s73, %s74
      %p83 = scmp.eq.s32.totalorder %s21, 0
      %p84 = por %p82, %p83
      %p85 = scmp.ne.s32.totalorder %s73, %s74
      %p86 = scmp.eq.s32.totalorder %s22, 1
      %p87 = por %p85, %p86
      %p89 = scmp.ne.s32.totalorder %s74, %s88
      %p90 = scmp.eq.s32.totalorder %s22, 0
      %p91 = por %p89, %p90
      %s92 = ssub.s32 %s16, %s23
      %p93 = scmp.eq.s32.totalorder %s92, 0
      %s95 = sadd.s32 %s94, 1
      %s96 = scalar_select %p93, %s94, %s95
      %p99 = pneg %p93
      %p100 = scmp.eq.s32.totalorder %s16, 1
      %p101 = por %p99, %p100
      %p102 = scmp.ne.s32.totalorder %s94, %s97
      %p103 = scmp.eq.s32.totalorder %s16, 0
      %p104 = por %p102, %p103
      %p105 = scmp.ne.s32.totalorder %s94, %s97
      %p106 = scmp.eq.s32.totalorder %s21, 1
      %p107 = por %p105, %p106
      %p108 = scmp.ne.s32.totalorder %s97, %s98
      %p109 = scmp.eq.s32.totalorder %s21, 0
      %p110 = por %p108, %p109
      %p111 = scmp.ne.s32.totalorder %s97, %s98
      %p112 = scmp.eq.s32.totalorder %s22, 1
      %p113 = por %p111, %p112
      %p115 = scmp.ne.s32.totalorder %s98, %s114
      %p116 = scmp.eq.s32.totalorder %s22, 0
      %p117 = por %p115, %p116
      %p118 = scmp.le.s32.totalorder 1, %s16
      %p119 = scmp.lt.s32.totalorder %s16, 3
      %p120 = pnand %p118, %p119
      %p121 = pneg %p120
      // Predicated region
      $region9: #{tpu_custom_call.1} parent=5 // pred_check
        _
      $region10: #{tpu_custom_call.1} parent=5 // pred_check_branch
        %123 = sbr.rel (%p120) target = $region12
      $region11: #{tpu_custom_call.1} parent=5 // pred_region
        %s124 = ssub.s32 %s16, 1
        // Predicated region
        $region13: #{tpu_custom_call.1} parent=11 // pred_check
          %p125 = pneg %p63
        $region14: #{tpu_custom_call.1} parent=11 // pred_check_branch
          %127 = sbr.rel (%p125) target = $region16
        $region15: #{tpu_custom_call.1} parent=11 // pred_region
          %s129 = ssub.s32 2048, 2048
          %130 = vsyncadd [#allocation6], %s129
          %s131 = sshll.u32 [#allocation5], 4
          %s132 = int_to_ptr.vmem [resolvable:$true] %s131
          %137 = dma.hbm_to_vmem [thread:$0]  %s1, 2048, %s132, [#allocation6], 128, 128, 8
        $region16: #{tpu_custom_call.1} parent=11 // pred_fallthru
          _
        // Predicated region
        $region17: #{tpu_custom_call.1} parent=11 // pred_check
          %p138 = pneg %p84
        $region18: #{tpu_custom_call.1} parent=11 // pred_check_branch
          %140 = sbr.rel (%p138) target = $region20
        $region19: #{tpu_custom_call.1} parent=11 // pred_region
          _
        $region20: #{tpu_custom_call.1} parent=11 // pred_fallthru
          _
      $region12: #{tpu_custom_call.1} parent=5 // pred_fallthru
        _
      %p141 = scmp.lt.s32.totalorder %s16, 2
      // Predicated region
      $region21: #{tpu_custom_call.1} parent=5 // pred_check
        %p142 = pneg %p141
      $region22: #{tpu_custom_call.1} parent=5 // pred_check_branch
        %144 = sbr.rel (%p142) target = $region24
      $region23: #{tpu_custom_call.1} parent=5 // pred_region
        // Predicated region
        $region25: #{tpu_custom_call.1} parent=23 // pred_check
          %p145 = pneg %p36
        $region26: #{tpu_custom_call.1} parent=23 // pred_check_branch
          %147 = sbr.rel (%p145) target = $region28
        $region27: #{tpu_custom_call.1} parent=23 // pred_region
          %s148 = sand.u32 %s26, 1
          %s149 = scalar_lea.sflag [#allocation3], %s148
          %s150 = sand.u32 %s26, 1
          %s151 = smul.addr %s150, 256
          %s152 = scalar_lea.vmem [#allocation2], %s151
          %s154 = ssub.s32 4096, 4096
          %155 = vsyncadd %s149, %s154
          %s156 = smul.addr %s16, 32
          %s157 = smul.addr %s156, 128
          %s158 = scalar_lea.hbm %s0, %s157
          %s159 = sshll.u32 %s152, 4
          %s160 = int_to_ptr.vmem [resolvable:$true] %s159
          %165 = dma.hbm_to_vmem [thread:$0]  %s158, 4096, %s160, %s149, 128, 128, 8
        $region28: #{tpu_custom_call.1} parent=23 // pred_fallthru
          _
      $region24: #{tpu_custom_call.1} parent=5 // pred_fallthru
        _
      %p166 = scmp.le.s32.totalorder 1, %s16
      %p167 = scmp.lt.s32.totalorder %s16, 3
      %p168 = pnand %p166, %p167
      %p169 = pneg %p168
      // Predicated region
      $region29: #{tpu_custom_call.1} parent=5 // pred_check
        _
      $region30: #{tpu_custom_call.1} parent=5 // pred_check_branch
        %171 = sbr.rel (%p168) target = $region32
      $region31: #{tpu_custom_call.1} parent=5 // pred_region
        %s172 = ssub.s32 %s16, 1
        %s173 = sand.u32 %s29, 1
        %s174 = scalar_lea.sflag [#allocation3], %s173
        %s175 = sand.u32 %s29, 1
        %s176 = smul.addr %s175, 256
        %s177 = scalar_lea.vmem [#allocation2], %s176
        // Predicated region
        $region33: #{tpu_custom_call.1} parent=31 // pred_check
          %p178 = pneg %p42
        $region34: #{tpu_custom_call.1} parent=31 // pred_check_branch
          %180 = sbr.rel (%p178) target = $region36
        $region35: #{tpu_custom_call.1} parent=31 // pred_region
          %181 = dma.done %s174, 4096
        $region36: #{tpu_custom_call.1} parent=31 // pred_fallthru
          _
        // Predicated region
        $region37: #{tpu_custom_call.1} parent=31 // pred_check
          %p182 = pneg %p63
        $region38: #{tpu_custom_call.1} parent=31 // pred_check_branch
          %184 = sbr.rel (%p182) target = $region40
        $region39: #{tpu_custom_call.1} parent=31 // pred_region
          %185 = dma.done [#allocation6], 2048
        $region40: #{tpu_custom_call.1} parent=31 // pred_fallthru
          _
        %s186 = sand.u32 %s29, 1
        %s187 = scalar_lea.sflag [#allocation3], %s186
        %s188 = sand.u32 %s29, 1
        %s189 = smul.addr %s188, 256
        %s190 = scalar_lea.vmem [#allocation2], %s189
        %p191 = pneg %p42
        %p192 = pneg %p39
        %p193 = pneg %p63
        %p194 = pneg %p60
        %p195 = pneg %p84
        %p196 = pneg %p81
        %p197 = pneg %p110
        %p198 = pneg %p107
        %s199 = sand.u32 %s97, 1
        %s200 = scalar_lea.sflag [#allocation4], %s199
        %s201 = sand.u32 %s97, 1
        %s202 = smul.addr %s201, 256
        %s203 = scalar_lea.vmem [#allocation7], %s202
        %v204 = vld [vmem:[%s177] sm:$0xff]
        %v205 = vld [vmem:[%s177 + $0x8] sm:$0xff]
        %v206 = vld [vmem:[%s177 + $0x10] sm:$0xff]
        %v207 = vld [vmem:[%s177 + $0x18] sm:$0xff]
        %v208 = vld [vmem:[%s177 + $0x20] sm:$0xff]
        %v209 = vld [vmem:[%s177 + $0x28] sm:$0xff]
        %v210 = vld [vmem:[%s177 + $0x30] sm:$0xff]
        %v211 = vld [vmem:[%s177 + $0x38] sm:$0xff]
        %v212 = vld [vmem:[%s177 + $0x40] sm:$0xff]
        %v213 = vld [vmem:[%s177 + $0x48] sm:$0xff]
        %v214 = vld [vmem:[%s177 + $0x50] sm:$0xff]
        %v215 = vld [vmem:[%s177 + $0x58] sm:$0xff]
        %v216 = vld [vmem:[%s177 + $0x60] sm:$0xff]
        %v217 = vld [vmem:[%s177 + $0x68] sm:$0xff]
        %v218 = vld [vmem:[%s177 + $0x70] sm:$0xff]
        %v219 = vld [vmem:[%s177 + $0x78] sm:$0xff]
        %v220 = vld [vmem:[%s177 + $0x80] sm:$0xff]
        %v221 = vld [vmem:[%s177 + $0x88] sm:$0xff]
        %v222 = vld [vmem:[%s177 + $0x90] sm:$0xff]
        %v223 = vld [vmem:[%s177 + $0x98] sm:$0xff]
        %v224 = vld [vmem:[%s177 + $0xa0] sm:$0xff]
        %v225 = vld [vmem:[%s177 + $0xa8] sm:$0xff]
        %v226 = vld [vmem:[%s177 + $0xb0] sm:$0xff]
        %v227 = vld [vmem:[%s177 + $0xb8] sm:$0xff]
        %v228 = vld [vmem:[%s177 + $0xc0] sm:$0xff]
        %v229 = vld [vmem:[%s177 + $0xc8] sm:$0xff]
        %v230 = vld [vmem:[%s177 + $0xd0] sm:$0xff]
        %v231 = vld [vmem:[%s177 + $0xd8] sm:$0xff]
        %v232 = vld [vmem:[%s177 + $0xe0] sm:$0xff]
        %v233 = vld [vmem:[%s177 + $0xe8] sm:$0xff]
        %v234 = vld [vmem:[%s177 + $0xf0] sm:$0xff]
        %v235 = vld [vmem:[%s177 + $0xf8] sm:$0xff]
        %v236 = vadd.f32 %v204, %v205
        %v237 = vadd.f32 %v236, %v206
        %v238 = vadd.f32 %v237, %v207
        %v239 = vadd.f32 %v238, %v208
        %v240 = vadd.f32 %v239, %v209
        %v241 = vadd.f32 %v240, %v210
        %v242 = vadd.f32 %v241, %v211
        %v243 = vadd.f32 %v242, %v212
        %v244 = vadd.f32 %v243, %v213
        %v245 = vadd.f32 %v244, %v214
        %v246 = vadd.f32 %v245, %v215
        %v247 = vadd.f32 %v246, %v216
        %v248 = vadd.f32 %v247, %v217
        %v249 = vadd.f32 %v248, %v218
        %v250 = vadd.f32 %v249, %v219
        %v251 = vadd.f32 %v250, %v220
        %v252 = vadd.f32 %v251, %v221
        %v253 = vadd.f32 %v252, %v222
        %v254 = vadd.f32 %v253, %v223
        %v255 = vadd.f32 %v254, %v224
        %v256 = vadd.f32 %v255, %v225
        %v257 = vadd.f32 %v256, %v226
        %v258 = vadd.f32 %v257, %v227
        %v259 = vadd.f32 %v258, %v228
        %v260 = vadd.f32 %v259, %v229
        %v261 = vadd.f32 %v260, %v230
        %v262 = vadd.f32 %v261, %v231
        %v263 = vadd.f32 %v262, %v232
        %v264 = vadd.f32 %v263, %v233
        %v265 = vadd.f32 %v264, %v234
        %v266 = vadd.f32 %v265, %v235
        %v267 = vrot.slane %v266, 4
        %v268 = vadd.f32 %v266, %v267
        %v269 = vrot.slane %v268, 2
        %v270 = vadd.f32 %v268, %v269
        %v271 = vrot.slane %v270, 1
        %v272 = vadd.f32 %v270, %v271
        %v273 = vmul.f32 %v272, 0.00390625
        %v274 = vld [vmem:[#allocation5] sm:$0xff]
        %v275 = vld [vmem:[#allocation5 + $0x8] sm:$0xff]
        %v276 = vld [vmem:[#allocation5 + $0x10] sm:$0xff]
        %v277 = vld [vmem:[#allocation5 + $0x18] sm:$0xff]
        %v278 = vld [vmem:[#allocation5 + $0x20] sm:$0xff]
        %v279 = vld [vmem:[#allocation5 + $0x28] sm:$0xff]
        %v280 = vld [vmem:[#allocation5 + $0x30] sm:$0xff]
        %v281 = vld [vmem:[#allocation5 + $0x38] sm:$0xff]
        %v282 = vld [vmem:[#allocation5 + $0x40] sm:$0xff]
        %v283 = vld [vmem:[#allocation5 + $0x48] sm:$0xff]
        %v284 = vld [vmem:[#allocation5 + $0x50] sm:$0xff]
        %v285 = vld [vmem:[#allocation5 + $0x58] sm:$0xff]
        %v286 = vld [vmem:[#allocation5 + $0x60] sm:$0xff]
        %v287 = vld [vmem:[#allocation5 + $0x68] sm:$0xff]
        %v288 = vld [vmem:[#allocation5 + $0x70] sm:$0xff]
        %v289 = vld [vmem:[#allocation5 + $0x78] sm:$0xff]
        %v290 = vld [vmem:[%s2] sm:$0x1]
        %291 = vmatprep.subr.mxu0 0.0
        %292 = vmatpush1.msra.mxu0 %v289
        %293 = vmatprep.subr.mxu0 0.0
        %294 = vmatpush1.msra.mxu0 %v288
        %295 = vmatprep.subr.mxu0 0.0
        %296 = vmatpush1.msra.mxu0 %v287
        %297 = vmatprep.subr.mxu0 0.0
        %298 = vmatpush1.msra.mxu0 %v286
        %299 = vmatprep.subr.mxu0 0.0
        %300 = vmatpush1.msra.mxu0 %v285
        %301 = vmatprep.subr.mxu0 0.0
        %302 = vmatpush1.msra.mxu0 %v284
        %303 = vmatprep.subr.mxu0 0.0
        %304 = vmatpush1.msra.mxu0 %v283
        %305 = vmatprep.subr.mxu0 0.0
        %306 = vmatpush1.msra.mxu0 %v282
        %307 = vmatprep.subr.mxu0 0.0
        %308 = vmatpush1.msra.mxu0 %v281
        %309 = vmatprep.subr.mxu0 0.0
        %310 = vmatpush1.msra.mxu0 %v280
        %311 = vmatprep.subr.mxu0 0.0
        %312 = vmatpush1.msra.mxu0 %v279
        %313 = vmatprep.subr.mxu0 0.0
        %314 = vmatpush1.msra.mxu0 %v278
        %315 = vmatprep.subr.mxu0 0.0
        %316 = vmatpush1.msra.mxu0 %v277
        %317 = vmatprep.subr.mxu0 0.0
        %318 = vmatpush1.msra.mxu0 %v276
        %319 = vmatprep.subr.mxu0 0.0
        %320 = vmatpush1.msra.mxu0 %v275
        %321 = vmatprep.subr.mxu0 0.0
        %322 = vmatpush1.msra.mxu0 %v274
        %323 = vmatprep.subr.mxu0 0.0
        %324 = vmatpush2.msra.mxu0 0.0
        %325 = vmatprep.subr.mxu0 0.0
        %326 = vmatpush2.msra.mxu0 0.0
        %327 = vmatprep.subr.mxu0 0.0
        %328 = vmatpush2.msra.mxu0 0.0
        %329 = vmatprep.subr.mxu0 0.0
        %330 = vmatpush2.msra.mxu0 0.0
        %331 = vmatprep.subr.mxu0 0.0
        %332 = vmatpush2.msra.mxu0 0.0
        %333 = vmatprep.subr.mxu0 0.0
        %334 = vmatpush2.msra.mxu0 0.0
        %335 = vmatprep.subr.mxu0 0.0
        %336 = vmatpush2.msra.mxu0 0.0
        %337 = vmatprep.subr.mxu0 0.0
        %338 = vmatpush2.msra.mxu0 0.0
        %339 = vmatprep.subr.mxu0 0.0
        %340 = vmatpush2.msra.mxu0 0.0
        %341 = vmatprep.subr.mxu0 0.0
        %342 = vmatpush2.msra.mxu0 0.0
        %343 = vmatprep.subr.mxu0 0.0
        %344 = vmatpush2.msra.mxu0 0.0
        %345 = vmatprep.subr.mxu0 0.0
        %346 = vmatpush2.msra.mxu0 0.0
        %347 = vmatprep.subr.mxu0 0.0
        %348 = vmatpush2.msra.mxu0 0.0
        %349 = vmatprep.subr.mxu0 0.0
        %350 = vmatpush2.msra.mxu0 0.0
        %351 = vmatprep.subr.mxu0 0.0
        %352 = vmatpush2.msra.mxu0 0.0
        %353 = vmatprep.subr.mxu0 0.0
        %354 = vmatpush2.msra.mxu0 0.0
        %355 = vmatprep.mubr.f32.mxu0 0.0
        %356 = vmatmul.mubr.f32.gmra.mxu0 %v273
        %v357 = vpop.f32.mrf.mxu0
        %v358 = vadd.f32 %v290, %v357
        %v359 = vpop.f32.mrf.mxu0
        %360 = vdwg.mxu0
        %v361 = vmul.f32 %v358, 0.16666667
        %v362 = vadd.f32 %v361, 0.5
        %v363 = vmax.f32 %v362, 0.0
        %v364 = vmin.f32 %v363, 1.0
        %v365 = vlaneseq
        %v366 = vshrl.u32 %v365, 7
        %v367 = vsub.s32 0, %v366
        %v368 = vrot.slane %v364, %v367
        %v369 = vmul.f32 %v204, %v368
        %v370 = vmul.f32 %v205, %v368
        %v371 = vmul.f32 %v206, %v368
        %v372 = vmul.f32 %v207, %v368
        %v373 = vmul.f32 %v208, %v368
        %v374 = vmul.f32 %v209, %v368
        %v375 = vmul.f32 %v210, %v368
        %v376 = vmul.f32 %v211, %v368
        %v377 = vmul.f32 %v212, %v368
        %v378 = vmul.f32 %v213, %v368
        %v379 = vmul.f32 %v214, %v368
        %v380 = vmul.f32 %v215, %v368
        %v381 = vmul.f32 %v216, %v368
        %v382 = vmul.f32 %v217, %v368
        %v383 = vmul.f32 %v218, %v368
        %v384 = vmul.f32 %v219, %v368
        %v385 = vmul.f32 %v220, %v368
        %v386 = vmul.f32 %v221, %v368
        %v387 = vmul.f32 %v222, %v368
        %v388 = vmul.f32 %v223, %v368
        %v389 = vmul.f32 %v224, %v368
        %v390 = vmul.f32 %v225, %v368
        %v391 = vmul.f32 %v226, %v368
        %v392 = vmul.f32 %v227, %v368
        %v393 = vmul.f32 %v228, %v368
        %v394 = vmul.f32 %v229, %v368
        %v395 = vmul.f32 %v230, %v368
        %v396 = vmul.f32 %v231, %v368
        %v397 = vmul.f32 %v232, %v368
        %v398 = vmul.f32 %v233, %v368
        %v399 = vmul.f32 %v234, %v368
        %v400 = vmul.f32 %v235, %v368
        %401 = vst [vmem:[%s203] sm:$0xff] %v369
        %402 = vst [vmem:[%s203 + $0x8] sm:$0xff] %v370
        %403 = vst [vmem:[%s203 + $0x10] sm:$0xff] %v371
        %404 = vst [vmem:[%s203 + $0x18] sm:$0xff] %v372
        %405 = vst [vmem:[%s203 + $0x20] sm:$0xff] %v373
        %406 = vst [vmem:[%s203 + $0x28] sm:$0xff] %v374
        %407 = vst [vmem:[%s203 + $0x30] sm:$0xff] %v375
        %408 = vst [vmem:[%s203 + $0x38] sm:$0xff] %v376
        %409 = vst [vmem:[%s203 + $0x40] sm:$0xff] %v377
        %410 = vst [vmem:[%s203 + $0x48] sm:$0xff] %v378
        %411 = vst [vmem:[%s203 + $0x50] sm:$0xff] %v379
        %412 = vst [vmem:[%s203 + $0x58] sm:$0xff] %v380
        %413 = vst [vmem:[%s203 + $0x60] sm:$0xff] %v381
        %414 = vst [vmem:[%s203 + $0x68] sm:$0xff] %v382
        %415 = vst [vmem:[%s203 + $0x70] sm:$0xff] %v383
        %416 = vst [vmem:[%s203 + $0x78] sm:$0xff] %v384
        %417 = vst [vmem:[%s203 + $0x80] sm:$0xff] %v385
        %418 = vst [vmem:[%s203 + $0x88] sm:$0xff] %v386
        %419 = vst [vmem:[%s203 + $0x90] sm:$0xff] %v387
        %420 = vst [vmem:[%s203 + $0x98] sm:$0xff] %v388
        %421 = vst [vmem:[%s203 + $0xa0] sm:$0xff] %v389
        %422 = vst [vmem:[%s203 + $0xa8] sm:$0xff] %v390
        %423 = vst [vmem:[%s203 + $0xb0] sm:$0xff] %v391
        %424 = vst [vmem:[%s203 + $0xb8] sm:$0xff] %v392
        %425 = vst [vmem:[%s203 + $0xc0] sm:$0xff] %v393
        %426 = vst [vmem:[%s203 + $0xc8] sm:$0xff] %v394
        %427 = vst [vmem:[%s203 + $0xd0] sm:$0xff] %v395
        %428 = vst [vmem:[%s203 + $0xd8] sm:$0xff] %v396
        %429 = vst [vmem:[%s203 + $0xe0] sm:$0xff] %v397
        %430 = vst [vmem:[%s203 + $0xe8] sm:$0xff] %v398
        %431 = vst [vmem:[%s203 + $0xf0] sm:$0xff] %v399
        %432 = vst [vmem:[%s203 + $0xf8] sm:$0xff] %v400
        %s433 = sand.u32 %s97, 1
        %s434 = scalar_lea.sflag [#allocation4], %s433
        %s435 = sand.u32 %s97, 1
        %s436 = smul.addr %s435, 256
        %s437 = scalar_lea.vmem [#allocation7], %s436
        // Predicated region
        $region41: #{tpu_custom_call.1} parent=31 // pred_check
          %p438 = pneg %p107
        $region42: #{tpu_custom_call.1} parent=31 // pred_check_branch
          %440 = sbr.rel (%p438) target = $region44
        $region43: #{tpu_custom_call.1} parent=31 // pred_region
          %s442 = ssub.s32 4096, 4096
          %443 = vsyncadd %s434, %s442
          %s444 = smul.addr %s21, 32
          %s445 = smul.addr %s444, 128
          %s446 = scalar_lea.hbm %s3, %s445
          %s447 = sshll.u32 %s437, 4
          %s448 = int_to_ptr.vmem [resolvable:$true] %s447
          %453 = dma.vmem_to_hbm [thread:$0]  %s448, 4096, %s446, %s434, 128, 128, 8
        $region44: #{tpu_custom_call.1} parent=31 // pred_fallthru
          _
      $region32: #{tpu_custom_call.1} parent=5 // pred_fallthru
        _
      %p454 = scmp.le.s32.totalorder 2, %s16
      // Predicated region
      $region45: #{tpu_custom_call.1} parent=5 // pred_check
        %p455 = pneg %p454
      $region46: #{tpu_custom_call.1} parent=5 // pred_check_branch
        %457 = sbr.rel (%p455) target = $region48
      $region47: #{tpu_custom_call.1} parent=5 // pred_region
        %s458 = ssub.s32 %s16, 2
        // Predicated region
        $region49: #{tpu_custom_call.1} parent=47 // pred_check
          %p459 = pneg %p113
        $region50: #{tpu_custom_call.1} parent=47 // pred_check_branch
          %461 = sbr.rel (%p459) target = $region52
        $region51: #{tpu_custom_call.1} parent=47 // pred_region
          %s462 = sand.u32 %s98, 1
          %s463 = scalar_lea.sflag [#allocation4], %s462
          %s464 = sand.u32 %s98, 1
          %s465 = smul.addr %s464, 256
          %s466 = scalar_lea.vmem [#allocation7], %s465
          %467 = dma.done %s463, 4096
        $region52: #{tpu_custom_call.1} parent=47 // pred_fallthru
          _
      $region48: #{tpu_custom_call.1} parent=5 // pred_fallthru
        _
    $region6: #{tpu_custom_call.1} parent=1 // loop_footer
      %s20 = sadd.s32 1, %s16
    $region7: #{tpu_custom_call.1} parent=1 // loop_footer_branch
      %15 = sbr.rel target = $region3
    $region8: #{tpu_custom_call.1} parent=1 // loop_exit
      _
    %468 = vsyncpa [#allocation3], 1
    %s469 = scalar_lea.sflag [#allocation3], 1
    %470 = vsyncpa %s469, 1
    %471 = vsyncpa [#allocation6], 1
    %472 = vsyncpa [#allocation4], 1
    %s473 = scalar_lea.sflag [#allocation4], 1
    %474 = vsyncpa %s473, 1

</llo_original>
